<compile_context>
chip_gen: v6e
topology: v6e:2x2x1
jax: 0.10.0
libtpu: 0.0.40
codegen_flags: <defaults>
</compile_context>

<pallas_src>
import jax
import jax.numpy as jnp
from jax.experimental import pallas as pl
from jax.experimental.pallas import tpu as pltpu


def _round_up(n, m):
    return ((n + m - 1) // m) * m


def _netf_kernel(x_ref, w1_ref, b1_ref, w2_ref, b2_ref, w3_ref, b3_ref, o_ref):
    # x arrives in f32 straight from HBM; the f32->bf16 cast happens here, in
    # registers.  Weights are already bf16.  MXU accumulates in f32; bias add
    # and ReLU run in f32; activations are re-cast to bf16 only to feed the
    # next MXU pass.
    x = x_ref[...].astype(jnp.bfloat16)
    h1 = jnp.dot(x, w1_ref[...], preferred_element_type=jnp.float32) + b1_ref[...]
    h1 = jnp.maximum(h1, 0.0).astype(jnp.bfloat16)
    h2 = jnp.dot(h1, w2_ref[...], preferred_element_type=jnp.float32) + b2_ref[...]
    h2 = jnp.maximum(h2, 0.0).astype(jnp.bfloat16)
    out = jnp.dot(h2, w3_ref[...], preferred_element_type=jnp.float32) + b3_ref[...]
    o_ref[...] = out.astype(o_ref.dtype)


def prepare_params(params):
    """Cast weights to bf16 ONCE (outside the per-call path); biases stay f32."""
    return {
        "w1": params["w1"].astype(jnp.bfloat16),
        "w2": params["w2"].astype(jnp.bfloat16),
        "w3": params["w3"].astype(jnp.bfloat16),
        "b1": params["b1"],
        "b2": params["b2"],
        "b3": params["b3"],
    }


def netf_forward(x, params, *, block_rows=256, out_dtype=None):
    """x: (batch, bf) float32.  params: pre-transposed weights / biases
    (ideally already bf16 via prepare_params)."""
    batch, bf = x.shape
    hidden = 4 * bf
    out_dtype = x.dtype if out_dtype is None else out_dtype

    def _bf16(w):
        return w if w.dtype == jnp.bfloat16 else w.astype(jnp.bfloat16)

    w1, w2, w3 = _bf16(params["w1"]), _bf16(params["w2"]), _bf16(params["w3"])
    b1, b2, b3 = params["b1"], params["b2"], params["b3"]

    # Row tiling: single full-batch tile when it fits (no pad), otherwise
    # 16-aligned tiles of ~block_rows with minimal padding.
    if batch <= block_rows:
        tm = batch
        padded = batch
        xp = x
    else:
        tm = _round_up(block_rows, 16)
        padded = _round_up(batch, tm)
        xp = jnp.pad(x, ((0, padded - batch), (0, 0))) if padded != batch else x

    grid = (padded // tm,)
    const2 = lambda i: (0, 0)  # weights/biases: same block every step -> VMEM-resident

    flops = 2 * padded * (bf * hidden + hidden * hidden + hidden * bf)
    bytes_accessed = (
        padded * bf * 4                                # x (f32)
        + (w1.size + w2.size + w3.size) * 2            # weights (bf16)
        + (b1.size + b2.size + b3.size) * 4            # biases (f32)
        + padded * bf * jnp.dtype(out_dtype).itemsize  # output
    )

    out = pl.pallas_call(
        _netf_kernel,
        out_shape=jax.ShapeDtypeStruct((padded, bf), out_dtype),
        grid=grid,
        in_specs=[
            pl.BlockSpec((tm, bf), lambda i: (i, 0)),   # x tile (pipelined, f32)
            pl.BlockSpec((bf, hidden), const2),         # W1 (bf16)
            pl.BlockSpec((1, hidden), const2),          # b1 (f32)
            pl.BlockSpec((hidden, hidden), const2),     # W2 (bf16)
            pl.BlockSpec((1, hidden), const2),          # b2 (f32)
            pl.BlockSpec((hidden, bf), const2),         # W3 (bf16)
            pl.BlockSpec((1, bf), const2),              # b3 (f32)
        ],
        out_specs=pl.BlockSpec((tm, bf), lambda i: (i, 0)),
        compiler_params=pltpu.CompilerParams(
            dimension_semantics=("parallel",)),         # 2x on v7x (2 TCs) at large batch
        cost_estimate=pl.CostEstimate(
            flops=flops, transcendentals=0, bytes_accessed=bytes_accessed),
    )(xp, w1, b1, w2, b2, w3, b3)

    return out if padded == batch else out[:batch]


def init_params(key, bf):
    """Deterministic init mimicking nn.Linear shapes.

    PyTorch stores W as (out, in); we store the transpose (in, out) so the
    kernel computes x @ W directly.  Biases are (1, out) to broadcast over
    the batch dimension.
    """
    hidden = 4 * bf
    k1, k2, k3, k4, k5, k6 = jax.random.split(key, 6)

    def lin(kw, kb, fan_in, fan_out):
        bound = 1.0 / jnp.sqrt(fan_in)
        w = jax.random.uniform(kw, (fan_in, fan_out), jnp.float32, -bound, bound)
        b = jax.random.uniform(kb, (1, fan_out), jnp.float32, -bound, bound)
        return w, b

    w1, b1 = lin(k1, k2, bf, hidden)
    w2, b2 = lin(k3, k4, hidden, hidden)
    w3, b3 = lin(k5, k6, hidden, bf)
    return {"w1": w1, "b1": b1, "w2": w2, "b2": b2, "w3": w3, "b3": b3}


def netf_reference_f32(x, p):
    """Full-precision reference (PyTorch semantics)."""
    h1 = jnp.maximum(x @ p["w1"] + p["b1"], 0.0)
    h2 = jnp.maximum(h1 @ p["w2"] + p["b2"], 0.0)
    return h2 @ p["w3"] + p["b3"]


def netf_reference_bf16(x, p):
    """Reference with the same bf16-input / f32-accumulate numerics as the kernel."""
    w1 = p["w1"].astype(jnp.bfloat16)
    w2 = p["w2"].astype(jnp.bfloat16)
    w3 = p["w3"].astype(jnp.bfloat16)
    h1 = jnp.maximum(
        jnp.dot(x.astype(jnp.bfloat16), w1, preferred_element_type=jnp.float32)
        + p["b1"], 0.0)
    h2 = jnp.maximum(
        jnp.dot(h1.astype(jnp.bfloat16), w2, preferred_element_type=jnp.float32)
        + p["b2"], 0.0)
    return (jnp.dot(h2.astype(jnp.bfloat16), w3, preferred_element_type=jnp.float32)
            + p["b3"])


if __name__ == "__main__":
    # args.bottleneck_factor = 32.  Three calls:
    #  - batch=8  : original tiny batch, single full-batch tile, no padding
    #  - batch=40 : non-multiple-of-8 batch, still a single full-batch tile
    #  - batch=600: exercises the tiled + padded multi-grid-step path (tm=256)
    bottleneck_factor = 32

    key = jax.random.PRNGKey(0)
    kx1, kx2, kx3, kp = jax.random.split(key, 4)
    params_f32 = init_params(kp, bottleneck_factor)
    params = prepare_params(params_f32)   # bf16 weights cached once

    fwd = jax.jit(netf_forward, static_argnames=("block_rows", "out_dtype"))

    ok = True
    for batch, block_rows, kx in ((8, 256, kx1), (40, 256, kx2), (600, 256, kx3)):
        x = jax.random.normal(kx, (batch, bottleneck_factor), jnp.float32)

        out = jax.block_until_ready(fwd(x, params, block_rows=block_rows))

        assert out.shape == (batch, bottleneck_factor)
        assert out.dtype == x.dtype
        ref_bf16 = netf_reference_bf16(x, params_f32)
        ref_f32 = netf_reference_f32(x, params_f32)
        # Tight check vs a reference using identical bf16/f32-accum numerics.
        ok &= bool(jnp.allclose(out, ref_bf16, atol=1e-3, rtol=1e-3))
        # Loose sanity check vs the full-f32 PyTorch-equivalent reference.
        ok &= bool(jnp.allclose(out, ref_f32, atol=5e-2, rtol=5e-2))

    assert ok, "Pallas output mismatch"
    print("KERNEL_OK")
</pallas_src>

<mosaic_0001>
module attributes {stable_mosaic.version = 11 : i64} {
  func.func @_netf_kernel(%arg0: i32, %arg1: memref<8x32xf32, #tpu.memory_space<vmem>>, %arg2: memref<32x128xbf16, #tpu.memory_space<vmem>>, %arg3: memref<1x128xf32, #tpu.memory_space<vmem>>, %arg4: memref<128x128xbf16, #tpu.memory_space<vmem>>, %arg5: memref<1x128xf32, #tpu.memory_space<vmem>>, %arg6: memref<128x32xbf16, #tpu.memory_space<vmem>>, %arg7: memref<1x32xf32, #tpu.memory_space<vmem>>, %arg8: memref<8x32xf32, #tpu.memory_space<vmem>>) attributes {dimension_semantics = [#tpu.dimension_semantics<parallel>], iteration_bounds = array<i64: 1>, scalar_prefetch = 0 : i64, scratch_operands = 0 : i64, tpu.core_type = #tpu.core_type<tc>, window_params = [{transform_indices = @transform_0, window_bounds = array<i64: 8, 32>}, {pipeline_mode = #tpu.pipeline_mode<synchronous>, transform_indices = @transform_1, window_bounds = array<i64: 32, 128>}, {pipeline_mode = #tpu.pipeline_mode<synchronous>, transform_indices = @transform_2, window_bounds = array<i64: 1, 128>}, {pipeline_mode = #tpu.pipeline_mode<synchronous>, transform_indices = @transform_3, window_bounds = array<i64: 128, 128>}, {pipeline_mode = #tpu.pipeline_mode<synchronous>, transform_indices = @transform_4, window_bounds = array<i64: 1, 128>}, {pipeline_mode = #tpu.pipeline_mode<synchronous>, transform_indices = @transform_5, window_bounds = array<i64: 128, 32>}, {pipeline_mode = #tpu.pipeline_mode<synchronous>, transform_indices = @transform_6, window_bounds = array<i64: 1, 32>}, {transform_indices = @transform_7, window_bounds = array<i64: 8, 32>}]} {
    %c0 = arith.constant 0 : index
    %c0_0 = arith.constant 0 : index
    %0 = vector.load %arg1[%c0, %c0_0] : memref<8x32xf32, #tpu.memory_space<vmem>>, vector<8x32xf32>
    %1 = arith.truncf %0 : vector<8x32xf32> to vector<8x32xbf16>
    %c0_1 = arith.constant 0 : index
    %c0_2 = arith.constant 0 : index
    %2 = vector.load %arg2[%c0_1, %c0_2] : memref<32x128xbf16, #tpu.memory_space<vmem>>, vector<32x128xbf16>
    %cst = arith.constant dense<0.000000e+00> : vector<8x128xf32>
    %3 = tpu.matmul %1, %2, %cst {dimension_numbers = #tpu.dot_dimension_numbers<[1], [0], [0], [1], [0, 0, 1, 1], [], []>} : vector<8x32xbf16>, vector<32x128xbf16>, vector<8x128xf32> -> vector<8x128xf32>
    %c0_3 = arith.constant 0 : index
    %c0_4 = arith.constant 0 : index
    %4 = vector.load %arg3[%c0_3, %c0_4] : memref<1x128xf32, #tpu.memory_space<vmem>>, vector<1x128xf32>
    %5 = vector.broadcast %4 : vector<1x128xf32> to vector<8x128xf32>
    %6 = arith.addf %3, %5 : vector<8x128xf32>
    %cst_5 = arith.constant 0.000000e+00 : f32
    %7 = vector.broadcast %cst_5 : f32 to vector<8x128xf32>
    %8 = arith.maximumf %6, %7 : vector<8x128xf32>
    %9 = arith.truncf %8 : vector<8x128xf32> to vector<8x128xbf16>
    %c0_6 = arith.constant 0 : index
    %c0_7 = arith.constant 0 : index
    %10 = vector.load %arg4[%c0_6, %c0_7] : memref<128x128xbf16, #tpu.memory_space<vmem>>, vector<128x128xbf16>
    %cst_8 = arith.constant dense<0.000000e+00> : vector<8x128xf32>
    %11 = tpu.matmul %9, %10, %cst_8 {dimension_numbers = #tpu.dot_dimension_numbers<[1], [0], [0], [1], [0, 0, 1, 1], [], []>} : vector<8x128xbf16>, vector<128x128xbf16>, vector<8x128xf32> -> vector<8x128xf32>
    %c0_9 = arith.constant 0 : index
    %c0_10 = arith.constant 0 : index
    %12 = vector.load %arg5[%c0_9, %c0_10] : memref<1x128xf32, #tpu.memory_space<vmem>>, vector<1x128xf32>
    %13 = vector.broadcast %12 : vector<1x128xf32> to vector<8x128xf32>
    %14 = arith.addf %11, %13 : vector<8x128xf32>
    %cst_11 = arith.constant 0.000000e+00 : f32
    %15 = vector.broadcast %cst_11 : f32 to vector<8x128xf32>
    %16 = arith.maximumf %14, %15 : vector<8x128xf32>
    %17 = arith.truncf %16 : vector<8x128xf32> to vector<8x128xbf16>
    %c0_12 = arith.constant 0 : index
    %c0_13 = arith.constant 0 : index
    %18 = vector.load %arg6[%c0_12, %c0_13] : memref<128x32xbf16, #tpu.memory_space<vmem>>, vector<128x32xbf16>
    %cst_14 = arith.constant dense<0.000000e+00> : vector<8x32xf32>
    %19 = tpu.matmul %17, %18, %cst_14 {dimension_numbers = #tpu.dot_dimension_numbers<[1], [0], [0], [1], [0, 0, 1, 1], [], []>} : vector<8x128xbf16>, vector<128x32xbf16>, vector<8x32xf32> -> vector<8x32xf32>
    %c0_15 = arith.constant 0 : index
    %c0_16 = arith.constant 0 : index
    %20 = vector.load %arg7[%c0_15, %c0_16] : memref<1x32xf32, #tpu.memory_space<vmem>>, vector<1x32xf32>
    %21 = vector.broadcast %20 : vector<1x32xf32> to vector<8x32xf32>
    %22 = arith.addf %19, %21 : vector<8x32xf32>
    %c0_17 = arith.constant 0 : index
    %c0_18 = arith.constant 0 : index
    %23 = vector.load %arg8[%c0_17, %c0_18] : memref<8x32xf32, #tpu.memory_space<vmem>>, vector<8x32xf32>
    tpu.vector_store %arg8[%c0_17, %c0_18], %22 {strides = array<i32>} : memref<8x32xf32, #tpu.memory_space<vmem>>, vector<8x32xf32>,
    return
  }
  func.func @transform_0(%arg0: i32) -> (i32, i32) {
    %c0_i32 = arith.constant 0 : i32
    %c0_i32_0 = arith.constant 0 : i32
    return %arg0, %c0_i32 : i32, i32
  }
  func.func @transform_1(%arg0: i32) -> (i32, i32) {
    %c0_i32 = arith.constant 0 : i32
    %c0_i32_0 = arith.constant 0 : i32
    %c0_i32_1 = arith.constant 0 : i32
    return %c0_i32, %c0_i32_0 : i32, i32
  }
  func.func @transform_2(%arg0: i32) -> (i32, i32) {
    %c0_i32 = arith.constant 0 : i32
    %c0_i32_0 = arith.constant 0 : i32
    %c0_i32_1 = arith.constant 0 : i32
    return %c0_i32, %c0_i32_0 : i32, i32
  }
  func.func @transform_3(%arg0: i32) -> (i32, i32) {
    %c0_i32 = arith.constant 0 : i32
    %c0_i32_0 = arith.constant 0 : i32
    %c0_i32_1 = arith.constant 0 : i32
    return %c0_i32, %c0_i32_0 : i32, i32
  }
  func.func @transform_4(%arg0: i32) -> (i32, i32) {
    %c0_i32 = arith.constant 0 : i32
    %c0_i32_0 = arith.constant 0 : i32
    %c0_i32_1 = arith.constant 0 : i32
    return %c0_i32, %c0_i32_0 : i32, i32
  }
  func.func @transform_5(%arg0: i32) -> (i32, i32) {
    %c0_i32 = arith.constant 0 : i32
    %c0_i32_0 = arith.constant 0 : i32
    %c0_i32_1 = arith.constant 0 : i32
    return %c0_i32, %c0_i32_0 : i32, i32
  }
  func.func @transform_6(%arg0: i32) -> (i32, i32) {
    %c0_i32 = arith.constant 0 : i32
    %c0_i32_0 = arith.constant 0 : i32
    %c0_i32_1 = arith.constant 0 : i32
    return %c0_i32, %c0_i32_0 : i32, i32
  }
  func.func @transform_7(%arg0: i32) -> (i32, i32) {
    %c0_i32 = arith.constant 0 : i32
    %c0_i32_0 = arith.constant 0 : i32
    return %arg0, %c0_i32 : i32, i32
  }
}

</mosaic_0001>

<llo_original>
// kernel: netf_forward.1
$region0: #{netf_forward.1}
  #allocation0 [shape = 'u32[]', space=smem, size = 0x4, offset = 0x4, fixed_abs, tag = 'smem constant byte address 0x4 - core index']
  #allocation1 [shape = 'u32[144,128]{1,0:T(1,128)}', space=vmem, size = 0x12000, scoped, tag = 'internal scratch']
  %s0 = inlined_call_operand.vmem [shape: f32[8,32], index: 0, kind: input, shape index: {}]
  %s1 = inlined_call_operand.vmem [shape: bf16[32,128], index: 1, kind: input, shape index: {}]
  %s2 = inlined_call_operand.vmem [shape: f32[1,128], index: 2, kind: input, shape index: {}]
  %s3 = inlined_call_operand.vmem [shape: bf16[128,128], index: 3, kind: input, shape index: {}]
  %s4 = inlined_call_operand.hbm [shape: f32[1,128], index: 4, kind: input, shape index: {}]
  %s5 = inlined_call_operand.vmem [shape: bf16[128,32], index: 5, kind: input, shape index: {}]
  %s6 = inlined_call_operand.hbm [shape: f32[1,32], index: 6, kind: input, shape index: {}]
  %s7 = inlined_call_operand.hbm [shape: f32[8,32], index: 7, kind: output, shape index: {}]
  %s8 = sld [smem:[#allocation0]]
  $region46: #{netf_forward.1} parent=0
    _
  %s10 = ssub.s32 1, %s8
  %s11 = scalar_select 0, %s10, %s8
  $region1: #{netf_forward.1} parent=0
    #allocation2 [shape = 'u8[512]{0}', space=vmem, size = 0x400, scoped, tag = 'input window, operand 4, single buffered']
    #allocation3 [shape = 's32[1]{0}', space=sflag, size = 0x4, scoped, tag = 'scoped memory for netf_forward.1']
    #allocation4 [shape = 's32[1]{0}', space=sflag, size = 0x4, scoped, tag = 'scoped memory for netf_forward.1']
    #allocation5 [shape = 'u8[512]{0}', space=vmem, size = 0x400, scoped, tag = 'input window, operand 6, single buffered']
    #allocation6 [shape = 's32[1]{0}', space=sflag, size = 0x4, scoped, tag = 'scoped memory for netf_forward.1']
    #allocation7 [shape = 'u8[4096]{0}', space=vmem, size = 0x1000, scoped, tag = 'output window, operand 0, single buffered']
    %12 = vsyncpa [#allocation3], 0
    %13 = vsyncpa [#allocation6], 0
    %14 = vsyncpa [#allocation4], 0
    // Predicated region
    $region2: #{netf_forward.1} parent=1 // pred_check
      _
    $region3: #{netf_forward.1} parent=1 // pred_check_branch
      %16 = sbr.rel (0) target = $region5
    $region4: #{netf_forward.1} parent=1 // pred_region
      _
    $region5: #{netf_forward.1} parent=1 // pred_fallthru
      _
    // Predicated region
    $region6: #{netf_forward.1} parent=1 // pred_check
      _
    $region7: #{netf_forward.1} parent=1 // pred_check_branch
      %18 = sbr.rel (0) target = $region9
    $region8: #{netf_forward.1} parent=1 // pred_region
      _
    $region9: #{netf_forward.1} parent=1 // pred_fallthru
      _
    // Predicated region
    $region10: #{netf_forward.1} parent=1 // pred_check
      _
    $region11: #{netf_forward.1} parent=1 // pred_check_branch
      %20 = sbr.rel (0) target = $region13
    $region12: #{netf_forward.1} parent=1 // pred_region
      _
    $region13: #{netf_forward.1} parent=1 // pred_fallthru
      _
    // Predicated region
    $region14: #{netf_forward.1} parent=1 // pred_check
      _
    $region15: #{netf_forward.1} parent=1 // pred_check_branch
      %22 = sbr.rel (0) target = $region17
    $region16: #{netf_forward.1} parent=1 // pred_region
      _
    $region17: #{netf_forward.1} parent=1 // pred_fallthru
      _
    // Predicated region
    $region18: #{netf_forward.1} parent=1 // pred_check
      _
    $region19: #{netf_forward.1} parent=1 // pred_check_branch
      %24 = sbr.rel (0) target = $region21
    $region20: #{netf_forward.1} parent=1 // pred_region
      %s26 = ssub.s32 16, 16
      %27 = vsyncadd [#allocation3], %s26
      %s29 = sshll.u32 [#allocation2], 4
      %s30 = int_to_ptr.vmem [resolvable:$true] %s29
      %32 = dma.hbm_to_vmem [thread:$0]  %s4, 16, %s30, [#allocation3]
    $region21: #{netf_forward.1} parent=1 // pred_fallthru
      _
    // Predicated region
    $region22: #{netf_forward.1} parent=1 // pred_check
      _
    $region23: #{netf_forward.1} parent=1 // pred_check_branch
      %34 = sbr.rel (0) target = $region25
    $region24: #{netf_forward.1} parent=1 // pred_region
      _
    $region25: #{netf_forward.1} parent=1 // pred_fallthru
      _
    // Predicated region
    $region26: #{netf_forward.1} parent=1 // pred_check
      _
    $region27: #{netf_forward.1} parent=1 // pred_check_branch
      %36 = sbr.rel (0) target = $region29
    $region28: #{netf_forward.1} parent=1 // pred_region
      %s38 = ssub.s32 16, 16
      %39 = vsyncadd [#allocation6], %s38
      %s41 = sshll.u32 [#allocation5], 4
      %s42 = int_to_ptr.vmem [resolvable:$true] %s41
      %44 = dma.hbm_to_vmem [thread:$0]  %s6, 16, %s42, [#allocation6]
    $region29: #{netf_forward.1} parent=1 // pred_fallthru
      _
    // Predicated region
    $region30: #{netf_forward.1} parent=1 // pred_check
      _
    $region31: #{netf_forward.1} parent=1 // pred_check_branch
      %46 = sbr.rel (0) target = $region33
    $region32: #{netf_forward.1} parent=1 // pred_region
      %47 = dma.done [#allocation3], 16
    $region33: #{netf_forward.1} parent=1 // pred_fallthru
      _
    // Predicated region
    $region34: #{netf_forward.1} parent=1 // pred_check
      _
    $region35: #{netf_forward.1} parent=1 // pred_check_branch
      %49 = sbr.rel (0) target = $region37
    $region36: #{netf_forward.1} parent=1 // pred_region
      %50 = dma.done [#allocation6], 16
    $region37: #{netf_forward.1} parent=1 // pred_fallthru
      _
    %v52 = vld [vmem:[%s0] sm:$0xff]
    %v53 = vpack.c.bf16 %v52, %v52
    %v54 = vld [vmem:[%s1] sm:$0xf]
    %v55 = vld [vmem:[%s1 + $0x4] sm:$0xf]
    %v56 = vld [vmem:[%s1 + $0x8] sm:$0xf]
    %v57 = vld [vmem:[%s1 + $0xc] sm:$0xf]
    %v58 = vld [vmem:[%s2] sm:$0x1]
    %v60 = vlaneseq
    %v61 = vshrl.u32 %v60, 7
    %v62 = vsub.s32 0, %v61
    %v63 = vrot.slane %v58, %v62
    %v69 = vunpack.c.l.b16 %v54
    %v70 = vunpack.c.l.b16 %v55
    %v71 = vunpack.c.l.b16 %v56
    %v72 = vunpack.c.l.b16 %v57
    %v73 = vpack.c.b16 %v70, %v69
    %v74 = vpack.c.b16 %v72, %v71
    %vm77 = vcmask 261120
    %v79 = vsel %vm77, %v53, 0
    %81 = vmatprep.subr.bf16.mxu0 0
    %82 = vmatpush1.bf16.msra.mxu0 0
    %83 = vmatprep.subr.bf16.mxu0 0
    %84 = vmatpush1.bf16.msra.mxu0 0
    %85 = vmatprep.subr.bf16.mxu0 0
    %86 = vmatpush1.bf16.msra.mxu0 0
    %87 = vmatprep.subr.bf16.mxu0 0
    %88 = vmatpush1.bf16.msra.mxu0 0
    %89 = vmatprep.subr.bf16.mxu0 0
    %90 = vmatpush1.bf16.msra.mxu0 0
    %91 = vmatprep.subr.bf16.mxu0 0
    %92 = vmatpush1.bf16.msra.mxu0 0
    %93 = vmatprep.subr.bf16.mxu0 0
    %94 = vmatpush1.bf16.msra.mxu0 %v74
    %95 = vmatprep.subr.bf16.mxu0 0
    %96 = vmatpush1.bf16.msra.mxu0 %v73
    %97 = vmatprep.subr.bf16.mxu0 0
    %98 = vmatpush2.bf16.msra.mxu0 0
    %99 = vmatprep.subr.bf16.mxu0 0
    %100 = vmatpush2.bf16.msra.mxu0 0
    %101 = vmatprep.subr.bf16.mxu0 0
    %102 = vmatpush2.bf16.msra.mxu0 0
    %103 = vmatprep.subr.bf16.mxu0 0
    %104 = vmatpush2.bf16.msra.mxu0 0
    %105 = vmatprep.subr.bf16.mxu0 0
    %106 = vmatpush2.bf16.msra.mxu0 0
    %107 = vmatprep.subr.bf16.mxu0 0
    %108 = vmatpush2.bf16.msra.mxu0 0
    %109 = vmatprep.subr.bf16.mxu0 0
    %110 = vmatpush2.bf16.msra.mxu0 0
    %111 = vmatprep.subr.bf16.mxu0 0
    %112 = vmatpush2.bf16.msra.mxu0 0
    %113 = vmatprep.mubr.bf16.mxu0 0
    %114 = vmatmul.mubr.bf16.gmra.mxu0 %v79
    %v115 = vpop.f32.mrf.mxu0
    %v116 = vadd.f32 %v63, %v115
    %v117 = vpop.f32.mrf.mxu0
    %v118 = vpop.f32.mrf.mxu0
    %v119 = vpop.f32.mrf.mxu0
    %120 = vdwg.mxu0
    %v121 = vmax.f32 %v116, 0.0
    %v122 = vpack.c.bf16 %v121, %v121
    %v123 = vld [vmem:[%s3] sm:$0xf]
    %v124 = vld [vmem:[%s3 + $0x4] sm:$0xf]
    %v125 = vld [vmem:[%s3 + $0x8] sm:$0xf]
    %v126 = vld [vmem:[%s3 + $0xc] sm:$0xf]
    %v127 = vld [vmem:[%s3 + $0x10] sm:$0xf]
    %v128 = vld [vmem:[%s3 + $0x14] sm:$0xf]
    %v129 = vld [vmem:[%s3 + $0x18] sm:$0xf]
    %v130 = vld [vmem:[%s3 + $0x1c] sm:$0xf]
    %v131 = vld [vmem:[%s3 + $0x20] sm:$0xf]
    %v132 = vld [vmem:[%s3 + $0x24] sm:$0xf]
    %v133 = vld [vmem:[%s3 + $0x28] sm:$0xf]
    %v134 = vld [vmem:[%s3 + $0x2c] sm:$0xf]
    %v135 = vld [vmem:[%s3 + $0x30] sm:$0xf]
    %v136 = vld [vmem:[%s3 + $0x34] sm:$0xf]
    %v137 = vld [vmem:[%s3 + $0x38] sm:$0xf]
    %v138 = vld [vmem:[%s3 + $0x3c] sm:$0xf]
    %v139 = vld [vmem:[#allocation2] sm:$0x1]
    %v141 = vlaneseq
    %v142 = vshrl.u32 %v141, 7
    %v143 = vsub.s32 0, %v142
    %v144 = vrot.slane %v139, %v143
    %v162 = vunpack.c.l.b16 %v123
    %v163 = vunpack.c.l.b16 %v124
    %v164 = vunpack.c.l.b16 %v125
    %v165 = vunpack.c.l.b16 %v126
    %v166 = vunpack.c.l.b16 %v127
    %v167 = vunpack.c.l.b16 %v128
    %v168 = vunpack.c.l.b16 %v129
    %v169 = vunpack.c.l.b16 %v130
    %v170 = vunpack.c.l.b16 %v131
    %v171 = vunpack.c.l.b16 %v132
    %v172 = vunpack.c.l.b16 %v133
    %v173 = vunpack.c.l.b16 %v134
    %v174 = vunpack.c.l.b16 %v135
    %v175 = vunpack.c.l.b16 %v136
    %v176 = vunpack.c.l.b16 %v137
    %v177 = vunpack.c.l.b16 %v138
    %v178 = vpack.c.b16 %v163, %v162
    %v179 = vpack.c.b16 %v165, %v164
    %v180 = vpack.c.b16 %v167, %v166
    %v181 = vpack.c.b16 %v169, %v168
    %v182 = vpack.c.b16 %v171, %v170
    %v183 = vpack.c.b16 %v173, %v172
    %v184 = vpack.c.b16 %v175, %v174
    %v185 = vpack.c.b16 %v177, %v176
    %194 = vmatprep.subr.bf16.mxu0 0
    %195 = vmatpush1.bf16.msra.mxu0 %v185
    %196 = vmatprep.subr.bf16.mxu0 0
    %197 = vmatpush1.bf16.msra.mxu0 %v184
    %198 = vmatprep.subr.bf16.mxu0 0
    %199 = vmatpush1.bf16.msra.mxu0 %v183
    %200 = vmatprep.subr.bf16.mxu0 0
    %201 = vmatpush1.bf16.msra.mxu0 %v182
    %202 = vmatprep.subr.bf16.mxu0 0
    %203 = vmatpush1.bf16.msra.mxu0 %v181
    %204 = vmatprep.subr.bf16.mxu0 0
    %205 = vmatpush1.bf16.msra.mxu0 %v180
    %206 = vmatprep.subr.bf16.mxu0 0
    %207 = vmatpush1.bf16.msra.mxu0 %v179
    %208 = vmatprep.subr.bf16.mxu0 0
    %209 = vmatpush1.bf16.msra.mxu0 %v178
    %210 = vmatprep.subr.bf16.mxu0 0
    %211 = vmatpush2.bf16.msra.mxu0 0
    %212 = vmatprep.subr.bf16.mxu0 0
    %213 = vmatpush2.bf16.msra.mxu0 0
    %214 = vmatprep.subr.bf16.mxu0 0
    %215 = vmatpush2.bf16.msra.mxu0 0
    %216 = vmatprep.subr.bf16.mxu0 0
    %217 = vmatpush2.bf16.msra.mxu0 0
    %218 = vmatprep.subr.bf16.mxu0 0
    %219 = vmatpush2.bf16.msra.mxu0 0
    %220 = vmatprep.subr.bf16.mxu0 0
    %221 = vmatpush2.bf16.msra.mxu0 0
    %222 = vmatprep.subr.bf16.mxu0 0
    %223 = vmatpush2.bf16.msra.mxu0 0
    %224 = vmatprep.subr.bf16.mxu0 0
    %225 = vmatpush2.bf16.msra.mxu0 0
    %226 = vmatprep.mubr.bf16.mxu0 0
    %227 = vmatmul.mubr.bf16.gmra.mxu0 %v122
    %v228 = vpop.f32.mrf.mxu0
    %v229 = vadd.f32 %v144, %v228
    %v230 = vpop.f32.mrf.mxu0
    %v231 = vpop.f32.mrf.mxu0
    %v232 = vpop.f32.mrf.mxu0
    %233 = vdwg.mxu0
    %v234 = vmax.f32 %v229, 0.0
    %v235 = vpack.c.bf16 %v234, %v234
    %v236 = vld [vmem:[%s5] sm:$0xf]
    %v237 = vld [vmem:[%s5 + $0x4] sm:$0xf]
    %v238 = vld [vmem:[%s5 + $0x8] sm:$0xf]
    %v239 = vld [vmem:[%s5 + $0xc] sm:$0xf]
    %v240 = vld [vmem:[%s5 + $0x10] sm:$0xf]
    %v241 = vld [vmem:[%s5 + $0x14] sm:$0xf]
    %v242 = vld [vmem:[%s5 + $0x18] sm:$0xf]
    %v243 = vld [vmem:[%s5 + $0x1c] sm:$0xf]
    %v244 = vld [vmem:[%s5 + $0x20] sm:$0xf]
    %v245 = vld [vmem:[%s5 + $0x24] sm:$0xf]
    %v246 = vld [vmem:[%s5 + $0x28] sm:$0xf]
    %v247 = vld [vmem:[%s5 + $0x2c] sm:$0xf]
    %v248 = vld [vmem:[%s5 + $0x30] sm:$0xf]
    %v249 = vld [vmem:[%s5 + $0x34] sm:$0xf]
    %v250 = vld [vmem:[%s5 + $0x38] sm:$0xf]
    %v251 = vld [vmem:[%s5 + $0x3c] sm:$0xf]
    %v252 = vld [vmem:[#allocation5] sm:$0x1]
    %v254 = vlaneseq
    %v255 = vshrl.u32 %v254, 7
    %v256 = vsub.s32 0, %v255
    %v257 = vrot.slane %v252, %v256
    %v275 = vunpack.c.l.b16 %v236
    %v276 = vunpack.c.l.b16 %v237
    %v277 = vunpack.c.l.b16 %v238
    %v278 = vunpack.c.l.b16 %v239
    %v279 = vunpack.c.l.b16 %v240
    %v280 = vunpack.c.l.b16 %v241
    %v281 = vunpack.c.l.b16 %v242
    %v282 = vunpack.c.l.b16 %v243
    %v283 = vunpack.c.l.b16 %v244
    %v284 = vunpack.c.l.b16 %v245
    %v285 = vunpack.c.l.b16 %v246
    %v286 = vunpack.c.l.b16 %v247
    %v287 = vunpack.c.l.b16 %v248
    %v288 = vunpack.c.l.b16 %v249
    %v289 = vunpack.c.l.b16 %v250
    %v290 = vunpack.c.l.b16 %v251
    %v291 = vpack.c.b16 %v276, %v275
    %v292 = vpack.c.b16 %v278, %v277
    %v293 = vpack.c.b16 %v280, %v279
    %v294 = vpack.c.b16 %v282, %v281
    %v295 = vpack.c.b16 %v284, %v283
    %v296 = vpack.c.b16 %v286, %v285
    %v297 = vpack.c.b16 %v288, %v287
    %v298 = vpack.c.b16 %v290, %v289
    %307 = vmatprep.subr.bf16.mxu0 0
    %308 = vmatpush1.bf16.msra.mxu0 %v298
    %309 = vmatprep.subr.bf16.mxu0 0
    %310 = vmatpush1.bf16.msra.mxu0 %v297
    %311 = vmatprep.subr.bf16.mxu0 0
    %312 = vmatpush1.bf16.msra.mxu0 %v296
    %313 = vmatprep.subr.bf16.mxu0 0
    %314 = vmatpush1.bf16.msra.mxu0 %v295
    %315 = vmatprep.subr.bf16.mxu0 0
    %316 = vmatpush1.bf16.msra.mxu0 %v294
    %317 = vmatprep.subr.bf16.mxu0 0
    %318 = vmatpush1.bf16.msra.mxu0 %v293
    %319 = vmatprep.subr.bf16.mxu0 0
    %320 = vmatpush1.bf16.msra.mxu0 %v292
    %321 = vmatprep.subr.bf16.mxu0 0
    %322 = vmatpush1.bf16.msra.mxu0 %v291
    %323 = vmatprep.subr.bf16.mxu0 0
    %324 = vmatpush2.bf16.msra.mxu0 0
    %325 = vmatprep.subr.bf16.mxu0 0
    %326 = vmatpush2.bf16.msra.mxu0 0
    %327 = vmatprep.subr.bf16.mxu0 0
    %328 = vmatpush2.bf16.msra.mxu0 0
    %329 = vmatprep.subr.bf16.mxu0 0
    %330 = vmatpush2.bf16.msra.mxu0 0
    %331 = vmatprep.subr.bf16.mxu0 0
    %332 = vmatpush2.bf16.msra.mxu0 0
    %333 = vmatprep.subr.bf16.mxu0 0
    %334 = vmatpush2.bf16.msra.mxu0 0
    %335 = vmatprep.subr.bf16.mxu0 0
    %336 = vmatpush2.bf16.msra.mxu0 0
    %337 = vmatprep.subr.bf16.mxu0 0
    %338 = vmatpush2.bf16.msra.mxu0 0
    %339 = vmatprep.mubr.bf16.mxu0 0
    %340 = vmatmul.mubr.bf16.gmra.mxu0 %v235
    %v341 = vpop.f32.mrf.mxu0
    %v342 = vadd.f32 %v257, %v341
    %v343 = vpop.f32.mrf.mxu0
    %v344 = vpop.f32.mrf.mxu0
    %v345 = vpop.f32.mrf.mxu0
    %346 = vdwg.mxu0
    %347 = vst.msk [vmem:[#allocation7] sm:$0xff] %vm77, %v342
    // Predicated region
    $region38: #{netf_forward.1} parent=1 // pred_check
      _
    $region39: #{netf_forward.1} parent=1 // pred_check_branch
      %349 = sbr.rel (0) target = $region41
    $region40: #{netf_forward.1} parent=1 // pred_region
      %s351 = ssub.s32 128, 128
      %352 = vsyncadd [#allocation4], %s351
      %s354 = sshll.u32 [#allocation7], 4
      %s355 = int_to_ptr.vmem [resolvable:$true] %s354
      %357 = dma.vmem_to_hbm [thread:$0]  %s355, 128, %s7, [#allocation4]
    $region41: #{netf_forward.1} parent=1 // pred_fallthru
      _
    // Predicated region
    $region42: #{netf_forward.1} parent=1 // pred_check
      _
    $region43: #{netf_forward.1} parent=1 // pred_check_branch
      %359 = sbr.rel (0) target = $region45
    $region44: #{netf_forward.1} parent=1 // pred_region
      %360 = dma.done [#allocation4], 128
    $region45: #{netf_forward.1} parent=1 // pred_fallthru
      _
    %361 = vsyncpa [#allocation3], 1
    %362 = vsyncpa [#allocation6], 1
    %363 = vsyncpa [#allocation4], 1

</llo_original>
